<compile_context>
chip_gen: v7x
topology: tpu7x:2x2x1
jax: 0.10.0
libtpu: 0.0.40
codegen_flags: <defaults>
</compile_context>

<pallas_src>
import functools

import jax
import jax.numpy as jnp
from jax.experimental import pallas as pl
from jax.experimental.pallas import tpu as pltpu


def _round_up(v: int, m: int) -> int:
    return (v + m - 1) // m * m


def _pick_tile(dim: int, cap: int) -> int:
    """Largest multiple of 128 that divides `dim` (itself a multiple of 128),
    not exceeding max(cap, 128)."""
    t = max(128, cap - cap % 128)
    while dim % t != 0:
        t -= 128
    return t


def _pad2d(a, r, c):
    return jnp.pad(a, ((0, r - a.shape[0]), (0, c - a.shape[1])))


# --------------------------------------------------------------- Phase 1: MLP
def _mlp_kernel(x_ref, w1_ref, b1_ref, w2_ref, b2_ref, q_ref):
    # bf16 MXU operands, f32 accumulation; swish via EUP exp + approx recip.
    h = jnp.dot(x_ref[...], w1_ref[...],
                preferred_element_type=jnp.float32) + b1_ref[...]
    h = h * pl.reciprocal(1.0 + jnp.exp(-h), approx=True)          # swish
    y = jnp.dot(h.astype(w2_ref.dtype), w2_ref[...],
                preferred_element_type=jnp.float32) + b2_ref[...]
    y = y * pl.reciprocal(1.0 + jnp.exp(-y), approx=True)          # swish
    q_ref[...] = y.astype(q_ref.dtype)


# ----------------------------------- Phase 2: mu_flat = A @ q (tiled, k last)
def _adj_matmul_kernel(a_ref, q_ref, mu_ref, acc_ref, *, tk):
    k = pl.program_id(2)

    @pl.when(k == 0)
    def _():
        acc_ref[...] = jnp.zeros_like(acc_ref)

    ks = pl.multiple_of(k * tk, tk)
    acc_ref[...] += jnp.dot(a_ref[...], q_ref[pl.ds(ks, tk), :],
                            preferred_element_type=jnp.float32)

    @pl.when(k == pl.num_programs(2) - 1)
    def _():
        mu_ref[...] = acc_ref[...].astype(mu_ref.dtype)


def dipole_layer_forward(x, vij, src, dst, w1, b1, w2, b2):
    """Pallas forward of Dipole_Layer (transform=True, no cutoff / cross_product)."""
    n, fa = x.shape
    fd = w2.shape[1]

    n_pad = _round_up(n, 128)
    fa_pad = _round_up(fa, 128)
    fd_pad = _round_up(fd, 128)

    # bf16 MXU operands; biases stay f32 (added to the f32 dot accumulator).
    x_p = _pad2d(x.astype(jnp.bfloat16), n_pad, fa_pad)
    w1_p = _pad2d(w1.astype(jnp.bfloat16), fa_pad, fa_pad)
    w2_p = _pad2d(w2.astype(jnp.bfloat16), fa_pad, fd_pad)
    b1_p = jnp.pad(b1.astype(jnp.float32), (0, fa_pad - fa)).reshape(1, fa_pad)
    b2_p = jnp.pad(b2.astype(jnp.float32), (0, fd_pad - fd)).reshape(1, fd_pad)

    # ---- Phase 1: q = swish(swish(x W1 + b1) W2 + b2), once per node tile.
    tn1 = _pick_tile(n_pad, 512)
    q_p = pl.pallas_call(
        _mlp_kernel,
        out_shape=jax.ShapeDtypeStruct((n_pad, fd_pad), jnp.bfloat16),
        grid_spec=pltpu.PrefetchScalarGridSpec(
            num_scalar_prefetch=0,
            grid=(n_pad // tn1,),
            in_specs=[
                pl.BlockSpec((tn1, fa_pad), lambda i: (i, 0)),
                pl.BlockSpec((fa_pad, fa_pad), lambda i: (0, 0)),   # resident
                pl.BlockSpec((1, fa_pad), lambda i: (0, 0)),        # resident
                pl.BlockSpec((fa_pad, fd_pad), lambda i: (0, 0)),   # resident
                pl.BlockSpec((1, fd_pad), lambda i: (0, 0)),        # resident
            ],
            out_specs=pl.BlockSpec((tn1, fd_pad), lambda i: (i, 0)),
        ),
        compiler_params=pltpu.CompilerParams(
            dimension_semantics=("parallel",),
            vmem_limit_bytes=32 * 1024 * 1024),
    )(x_p, w1_p, b1_p, w2_p, b2_p)

    # ---- Fold vij into the gather/scatter: weighted adjacency (O(E) build).
    #      A[c, dst[e], src[e]] += vij[e, c]; accumulate exactly in f32,
    #      cast once to bf16 (halves HBM streaming of the N^2-sized operand),
    #      and flatten the component axis into the row axis.
    adj = jnp.zeros((3, n_pad, n_pad), jnp.float32)
    adj = adj.at[:, dst, src].add(vij.T.astype(jnp.float32))
    adj = adj.reshape(3 * n_pad, n_pad).astype(jnp.bfloat16)

    # ---- Phase 2: mu_flat = A @ q, VMEM-budgeted large tiles, resident q.
    rows = 3 * n_pad
    tn = _pick_tile(rows, 512)
    tk = _pick_tile(n_pad, 512)
    tf = _pick_tile(fd_pad, 1024)

    budget = 40 * 1024 * 1024     # stays inside v7x's 64 MiB physical VMEM

    def vmem_bytes(tn_, tk_, tf_):
        return (2 * tn_ * tk_ * 2            # A tile, double-buffered, bf16
                + 2 * n_pad * tf_ * 2        # resident q column strip, bf16
                + tn_ * tf_ * 4              # f32 accumulator
                + 2 * tn_ * tf_ * 4)         # output tile, double-buffered, f32

    while vmem_bytes(tn, tk, tf) > budget and tf > 128:
        tf = _pick_tile(fd_pad, tf - 128)
    while vmem_bytes(tn, tk, tf) > budget and tn > 128:
        tn = _pick_tile(rows, tn - 128)

    mu_flat = pl.pallas_call(
        functools.partial(_adj_matmul_kernel, tk=tk),
        out_shape=jax.ShapeDtypeStruct((rows, fd_pad), jnp.float32),
        grid_spec=pltpu.PrefetchScalarGridSpec(
            num_scalar_prefetch=0,
            grid=(rows // tn, fd_pad // tf, n_pad // tk),
            in_specs=[
                pl.BlockSpec((tn, tk), lambda i, j, k: (i, k)),
                # q: full reduction extent, index invariant in i and k, so it
                # stays VMEM-resident across the whole k sweep (and across i
                # when fd_pad == tf, the common case).
                pl.BlockSpec((n_pad, tf), lambda i, j, k: (0, j)),
            ],
            out_specs=pl.BlockSpec((tn, tf), lambda i, j, k: (i, j)),
            scratch_shapes=[pltpu.VMEM((tn, tf), jnp.float32)],
        ),
        compiler_params=pltpu.CompilerParams(
            dimension_semantics=("parallel", "parallel", "arbitrary"),
            vmem_limit_bytes=48 * 1024 * 1024),
    )(adj, q_p)

    # Slice padding off and transpose to the PyTorch/DGL [N, Fd, 3] layout.
    mu = mu_flat.reshape(3, n_pad, fd_pad)[:, :n, :fd]
    return jnp.transpose(mu, (1, 2, 0))


# ------------------------------------------------------- pure-JAX reference
def _reference(x, vij, src, dst, w1, b1, w2, b2):
    hp = jax.lax.Precision.HIGHEST
    swish = lambda v: v * jax.nn.sigmoid(v)
    q = swish(jnp.dot(swish(jnp.dot(x, w1, precision=hp) + b1), w2,
                      precision=hp) + b2)
    mu_ij = vij[:, None, :] * q[src][:, :, None]                 # [E, Fd, 3]
    mu = jnp.zeros((x.shape[0], q.shape[1], 3), jnp.float32).at[dst].add(mu_ij)
    return mu


if __name__ == "__main__":
    key = jax.random.PRNGKey(0)
    k_x, k_v, k_s, k_d, k_w1, k_b1, k_w2, k_b2 = jax.random.split(key, 8)

    N, E = 16, 48            # nodes, edges
    FA, FD = 32, 64          # atom_features, dipole_features

    x = jax.random.normal(k_x, (N, FA), jnp.float32)
    vij = jax.random.normal(k_v, (E, 3), jnp.float32)
    src = jax.random.randint(k_s, (E,), 0, N, jnp.int32)
    dst = jax.random.randint(k_d, (E,), 0, N, jnp.int32)

    w1 = 0.2 * jax.random.normal(k_w1, (FA, FA), jnp.float32)
    b1 = 0.1 * jax.random.normal(k_b1, (FA,), jnp.float32)
    w2 = 0.2 * jax.random.normal(k_w2, (FA, FD), jnp.float32)
    b2 = 0.1 * jax.random.normal(k_b2, (FD,), jnp.float32)

    mu = jax.block_until_ready(
        dipole_layer_forward(x, vij, src, dst, w1, b1, w2, b2))

    ref = jax.block_until_ready(_reference(x, vij, src, dst, w1, b1, w2, b2))
    err = float(jnp.max(jnp.abs(mu - ref)) /
                jnp.maximum(1.0, jnp.max(jnp.abs(ref))))
    assert mu.shape == (N, FD, 3), mu.shape
    assert err < 2e-2, f"max relative-to-peak error too large: {err}"
    print("KERNEL_OK")
</pallas_src>

<mosaic_0001>
module attributes {stable_mosaic.version = 11 : i64} {
  func.func @_mlp_kernel(%arg0: i32, %arg1: memref<128x128xbf16, #tpu.memory_space<vmem>>, %arg2: memref<128x128xbf16, #tpu.memory_space<vmem>>, %arg3: memref<1x128xf32, #tpu.memory_space<vmem>>, %arg4: memref<128x128xbf16, #tpu.memory_space<vmem>>, %arg5: memref<1x128xf32, #tpu.memory_space<vmem>>, %arg6: memref<128x128xbf16, #tpu.memory_space<vmem>>) attributes {dimension_semantics = [#tpu.dimension_semantics<parallel>], iteration_bounds = array<i64: 1>, scalar_prefetch = 0 : i64, scratch_operands = 0 : i64, tpu.core_type = #tpu.core_type<tc>, window_params = [{transform_indices = @transform_0, window_bounds = array<i64: 128, 128>}, {pipeline_mode = #tpu.pipeline_mode<synchronous>, transform_indices = @transform_1, window_bounds = array<i64: 128, 128>}, {pipeline_mode = #tpu.pipeline_mode<synchronous>, transform_indices = @transform_2, window_bounds = array<i64: 1, 128>}, {pipeline_mode = #tpu.pipeline_mode<synchronous>, transform_indices = @transform_3, window_bounds = array<i64: 128, 128>}, {pipeline_mode = #tpu.pipeline_mode<synchronous>, transform_indices = @transform_4, window_bounds = array<i64: 1, 128>}, {transform_indices = @transform_5, window_bounds = array<i64: 128, 128>}]} {
    %c0 = arith.constant 0 : index
    %c0_0 = arith.constant 0 : index
    %0 = vector.load %arg1[%c0, %c0_0] : memref<128x128xbf16, #tpu.memory_space<vmem>>, vector<128x128xbf16>
    %c0_1 = arith.constant 0 : index
    %c0_2 = arith.constant 0 : index
    %1 = vector.load %arg2[%c0_1, %c0_2] : memref<128x128xbf16, #tpu.memory_space<vmem>>, vector<128x128xbf16>
    %cst = arith.constant dense<0.000000e+00> : vector<128x128xf32>
    %2 = tpu.matmul %0, %1, %cst {dimension_numbers = #tpu.dot_dimension_numbers<[1], [0], [0], [1], [0, 0, 1, 1], [], []>} : vector<128x128xbf16>, vector<128x128xbf16>, vector<128x128xf32> -> vector<128x128xf32>
    %c0_3 = arith.constant 0 : index
    %c0_4 = arith.constant 0 : index
    %3 = vector.load %arg3[%c0_3, %c0_4] : memref<1x128xf32, #tpu.memory_space<vmem>>, vector<1x128xf32>
    %4 = vector.broadcast %3 : vector<1x128xf32> to vector<128x128xf32>
    %5 = arith.addf %2, %4 : vector<128x128xf32>
    %cst_5 = arith.constant 0.000000e+00 : f32
    %6 = vector.broadcast %cst_5 : f32 to vector<128x128xf32>
    %7 = arith.subf %6, %5 : vector<128x128xf32>
    %8 = math.exp %7 : vector<128x128xf32>
    %cst_6 = arith.constant 1.000000e+00 : f32
    %9 = vector.broadcast %cst_6 : f32 to vector<128x128xf32>
    %10 = arith.addf %9, %8 : vector<128x128xf32>
    %11 = tpu.reciprocal %10 {approx = true} : vector<128x128xf32> -> vector<128x128xf32>
    %12 = arith.mulf %5, %11 : vector<128x128xf32>
    %13 = arith.truncf %12 : vector<128x128xf32> to vector<128x128xbf16>
    %c0_7 = arith.constant 0 : index
    %c0_8 = arith.constant 0 : index
    %14 = vector.load %arg4[%c0_7, %c0_8] : memref<128x128xbf16, #tpu.memory_space<vmem>>, vector<128x128xbf16>
    %cst_9 = arith.constant dense<0.000000e+00> : vector<128x128xf32>
    %15 = tpu.matmul %13, %14, %cst_9 {dimension_numbers = #tpu.dot_dimension_numbers<[1], [0], [0], [1], [0, 0, 1, 1], [], []>} : vector<128x128xbf16>, vector<128x128xbf16>, vector<128x128xf32> -> vector<128x128xf32>
    %c0_10 = arith.constant 0 : index
    %c0_11 = arith.constant 0 : index
    %16 = vector.load %arg5[%c0_10, %c0_11] : memref<1x128xf32, #tpu.memory_space<vmem>>, vector<1x128xf32>
    %17 = vector.broadcast %16 : vector<1x128xf32> to vector<128x128xf32>
    %18 = arith.addf %15, %17 : vector<128x128xf32>
    %cst_12 = arith.constant 0.000000e+00 : f32
    %19 = vector.broadcast %cst_12 : f32 to vector<128x128xf32>
    %20 = arith.subf %19, %18 : vector<128x128xf32>
    %21 = math.exp %20 : vector<128x128xf32>
    %cst_13 = arith.constant 1.000000e+00 : f32
    %22 = vector.broadcast %cst_13 : f32 to vector<128x128xf32>
    %23 = arith.addf %22, %21 : vector<128x128xf32>
    %24 = tpu.reciprocal %23 {approx = true} : vector<128x128xf32> -> vector<128x128xf32>
    %25 = arith.mulf %18, %24 : vector<128x128xf32>
    %26 = arith.truncf %25 : vector<128x128xf32> to vector<128x128xbf16>
    %c0_14 = arith.constant 0 : index
    %c0_15 = arith.constant 0 : index
    %27 = vector.load %arg6[%c0_14, %c0_15] : memref<128x128xbf16, #tpu.memory_space<vmem>>, vector<128x128xbf16>
    tpu.vector_store %arg6[%c0_14, %c0_15], %26 {strides = array<i32>} : memref<128x128xbf16, #tpu.memory_space<vmem>>, vector<128x128xbf16>,
    return
  }
  func.func @transform_0(%arg0: i32) -> (i32, i32) {
    %c0_i32 = arith.constant 0 : i32
    %c0_i32_0 = arith.constant 0 : i32
    return %arg0, %c0_i32 : i32, i32
  }
  func.func @transform_1(%arg0: i32) -> (i32, i32) {
    %c0_i32 = arith.constant 0 : i32
    %c0_i32_0 = arith.constant 0 : i32
    %c0_i32_1 = arith.constant 0 : i32
    return %c0_i32, %c0_i32_0 : i32, i32
  }
  func.func @transform_2(%arg0: i32) -> (i32, i32) {
    %c0_i32 = arith.constant 0 : i32
    %c0_i32_0 = arith.constant 0 : i32
    %c0_i32_1 = arith.constant 0 : i32
    return %c0_i32, %c0_i32_0 : i32, i32
  }
  func.func @transform_3(%arg0: i32) -> (i32, i32) {
    %c0_i32 = arith.constant 0 : i32
    %c0_i32_0 = arith.constant 0 : i32
    %c0_i32_1 = arith.constant 0 : i32
    return %c0_i32, %c0_i32_0 : i32, i32
  }
  func.func @transform_4(%arg0: i32) -> (i32, i32) {
    %c0_i32 = arith.constant 0 : i32
    %c0_i32_0 = arith.constant 0 : i32
    %c0_i32_1 = arith.constant 0 : i32
    return %c0_i32, %c0_i32_0 : i32, i32
  }
  func.func @transform_5(%arg0: i32) -> (i32, i32) {
    %c0_i32 = arith.constant 0 : i32
    %c0_i32_0 = arith.constant 0 : i32
    return %arg0, %c0_i32 : i32, i32
  }
}

</mosaic_0001>

<llo_original>
// kernel: tpu_custom_call.1
$region0: #{tpu_custom_call.1}
  #allocation0 [shape = 'u32[]', space=smem, size = 0x4, offset = 0x4, fixed_abs, tag = 'smem constant byte address 0x4 - core index']
  #allocation1 [shape = 'u32[144,128]{1,0:T(1,128)}', space=vmem, size = 0x12000, scoped, tag = 'internal scratch']
  %s0 = inlined_call_operand.hbm [shape: bf16[128,128], index: 0, kind: input, shape index: {}]
  %s1 = inlined_call_operand.hbm [shape: bf16[128,128], index: 1, kind: input, shape index: {}]
  %s2 = inlined_call_operand.vmem [shape: f32[1,128], index: 2, kind: input, shape index: {}]
  %s3 = inlined_call_operand.hbm [shape: bf16[128,128], index: 3, kind: input, shape index: {}]
  %s4 = inlined_call_operand.vmem [shape: f32[1,128], index: 4, kind: input, shape index: {}]
  %s5 = inlined_call_operand.hbm [shape: bf16[128,128], index: 5, kind: output, shape index: {}]
  %s6 = sld [smem:[#allocation0]]
  $region42: #{tpu_custom_call.1} parent=0
    _
  %s8 = ssub.s32 1, %s6
  %s9 = scalar_select 0, %s8, %s6
  $region1: #{tpu_custom_call.1} parent=0
    #allocation2 [shape = 'u8[32768]{0}', space=vmem, size = 0x8000, scoped, tag = 'input window, operand 0, single buffered']
    #allocation3 [shape = 's32[1]{0}', space=sflag, size = 0x4, scoped, tag = 'scoped memory for tpu_custom_call.1']
    #allocation4 [shape = 's32[1]{0}', space=sflag, size = 0x4, scoped, tag = 'scoped memory for tpu_custom_call.1']
    #allocation5 [shape = 'u8[32768]{0}', space=vmem, size = 0x8000, scoped, tag = 'input window, operand 1, single buffered']
    #allocation6 [shape = 's32[1]{0}', space=sflag, size = 0x4, scoped, tag = 'scoped memory for tpu_custom_call.1']
    #allocation7 [shape = 'u8[32768]{0}', space=vmem, size = 0x8000, scoped, tag = 'input window, operand 3, single buffered']
    #allocation8 [shape = 'u8[32768]{0}', space=vmem, size = 0x8000, scoped, tag = 'output window, operand 0, single buffered']
    %10 = vsyncpa [#allocation3], 0
    %11 = vsyncpa [#allocation6], 0
    %12 = vsyncpa [#allocation4], 0
    // Predicated region
    $region2: #{tpu_custom_call.1} parent=1 // pred_check
      _
    $region3: #{tpu_custom_call.1} parent=1 // pred_check_branch
      %14 = sbr.rel (0) target = $region5
    $region4: #{tpu_custom_call.1} parent=1 // pred_region
      %s16 = ssub.s32 1024, 1024
      %17 = vsyncadd [#allocation3], %s16
      %s18 = sshll.u32 [#allocation2], 4
      %s19 = int_to_ptr.vmem [resolvable:$true] %s18
      %24 = dma.hbm_to_vmem [thread:$0]  %s0, 1024, %s19, [#allocation3], 64, 64, 4
    $region5: #{tpu_custom_call.1} parent=1 // pred_fallthru
      _
    // Predicated region
    $region6: #{tpu_custom_call.1} parent=1 // pred_check
      _
    $region7: #{tpu_custom_call.1} parent=1 // pred_check_branch
      %26 = sbr.rel (0) target = $region9
    $region8: #{tpu_custom_call.1} parent=1 // pred_region
      %s28 = ssub.s32 1024, 1024
      %29 = vsyncadd [#allocation6], %s28
      %s30 = sshll.u32 [#allocation5], 4
      %s31 = int_to_ptr.vmem [resolvable:$true] %s30
      %36 = dma.hbm_to_vmem [thread:$0]  %s1, 1024, %s31, [#allocation6], 64, 64, 4
    $region9: #{tpu_custom_call.1} parent=1 // pred_fallthru
      _
    // Predicated region
    $region10: #{tpu_custom_call.1} parent=1 // pred_check
      _
    $region11: #{tpu_custom_call.1} parent=1 // pred_check_branch
      %38 = sbr.rel (0) target = $region13
    $region12: #{tpu_custom_call.1} parent=1 // pred_region
      _
    $region13: #{tpu_custom_call.1} parent=1 // pred_fallthru
      _
    // Predicated region
    $region14: #{tpu_custom_call.1} parent=1 // pred_check
      _
    $region15: #{tpu_custom_call.1} parent=1 // pred_check_branch
      %40 = sbr.rel (0) target = $region17
    $region16: #{tpu_custom_call.1} parent=1 // pred_region
      %s42 = ssub.s32 1024, 1024
      %43 = vsyncadd [#allocation6], %s42
      %s44 = sshll.u32 [#allocation7], 4
      %s45 = int_to_ptr.vmem [resolvable:$true] %s44
      %50 = dma.hbm_to_vmem [thread:$0]  %s3, 1024, %s45, [#allocation6], 64, 64, 4
    $region17: #{tpu_custom_call.1} parent=1 // pred_fallthru
      _
    // Predicated region
    $region18: #{tpu_custom_call.1} parent=1 // pred_check
      _
    $region19: #{tpu_custom_call.1} parent=1 // pred_check_branch
      %52 = sbr.rel (0) target = $region21
    $region20: #{tpu_custom_call.1} parent=1 // pred_region
      _
    $region21: #{tpu_custom_call.1} parent=1 // pred_fallthru
      _
    // Predicated region
    $region22: #{tpu_custom_call.1} parent=1 // pred_check
      _
    $region23: #{tpu_custom_call.1} parent=1 // pred_check_branch
      %54 = sbr.rel (0) target = $region25
    $region24: #{tpu_custom_call.1} parent=1 // pred_region
      %55 = dma.done [#allocation3], 1024
    $region25: #{tpu_custom_call.1} parent=1 // pred_fallthru
      _
    // Predicated region
    $region26: #{tpu_custom_call.1} parent=1 // pred_check
      _
    $region27: #{tpu_custom_call.1} parent=1 // pred_check_branch
      %57 = sbr.rel (0) target = $region29
    $region28: #{tpu_custom_call.1} parent=1 // pred_region
      %58 = dma.done [#allocation6], 1024
    $region29: #{tpu_custom_call.1} parent=1 // pred_fallthru
      _
    // Predicated region
    $region30: #{tpu_custom_call.1} parent=1 // pred_check
      _
    $region31: #{tpu_custom_call.1} parent=1 // pred_check_branch
      %60 = sbr.rel (0) target = $region33
    $region32: #{tpu_custom_call.1} parent=1 // pred_region
      %61 = dma.done [#allocation6], 1024
    $region33: #{tpu_custom_call.1} parent=1 // pred_fallthru
      _
    %v63 = vld [vmem:[#allocation2] sm:$0xf]
    %v64 = vld [vmem:[#allocation2 + $0x4] sm:$0xf]
    %v65 = vld [vmem:[#allocation2 + $0x8] sm:$0xf]
    %v66 = vld [vmem:[#allocation2 + $0xc] sm:$0xf]
    %v67 = vld [vmem:[#allocation2 + $0x10] sm:$0xf]
    %v68 = vld [vmem:[#allocation2 + $0x14] sm:$0xf]
    %v69 = vld [vmem:[#allocation2 + $0x18] sm:$0xf]
    %v70 = vld [vmem:[#allocation2 + $0x1c] sm:$0xf]
    %v71 = vld [vmem:[#allocation2 + $0x20] sm:$0xf]
    %v72 = vld [vmem:[#allocation2 + $0x24] sm:$0xf]
    %v73 = vld [vmem:[#allocation2 + $0x28] sm:$0xf]
    %v74 = vld [vmem:[#allocation2 + $0x2c] sm:$0xf]
    %v75 = vld [vmem:[#allocation2 + $0x30] sm:$0xf]
    %v76 = vld [vmem:[#allocation2 + $0x34] sm:$0xf]
    %v77 = vld [vmem:[#allocation2 + $0x38] sm:$0xf]
    %v78 = vld [vmem:[#allocation2 + $0x3c] sm:$0xf]
    %v79 = vld [vmem:[#allocation5] sm:$0xf]
    %v80 = vld [vmem:[#allocation5 + $0x4] sm:$0xf]
    %v81 = vld [vmem:[#allocation5 + $0x8] sm:$0xf]
    %v82 = vld [vmem:[#allocation5 + $0xc] sm:$0xf]
    %v83 = vld [vmem:[#allocation5 + $0x10] sm:$0xf]
    %v84 = vld [vmem:[#allocation5 + $0x14] sm:$0xf]
    %v85 = vld [vmem:[#allocation5 + $0x18] sm:$0xf]
    %v86 = vld [vmem:[#allocation5 + $0x1c] sm:$0xf]
    %v87 = vld [vmem:[#allocation5 + $0x20] sm:$0xf]
    %v88 = vld [vmem:[#allocation5 + $0x24] sm:$0xf]
    %v89 = vld [vmem:[#allocation5 + $0x28] sm:$0xf]
    %v90 = vld [vmem:[#allocation5 + $0x2c] sm:$0xf]
    %v91 = vld [vmem:[#allocation5 + $0x30] sm:$0xf]
    %v92 = vld [vmem:[#allocation5 + $0x34] sm:$0xf]
    %v93 = vld [vmem:[#allocation5 + $0x38] sm:$0xf]
    %v94 = vld [vmem:[#allocation5 + $0x3c] sm:$0xf]
    %v95 = vld [vmem:[%s2] sm:$0x1]
    %v97 = vlaneseq
    %v98 = vshrl.u32 %v97, 7
    %v99 = vsub.s32 0, %v98
    %v100 = vrot.slane %v95, %v99
    %v118 = vunpack.c.l.b16 %v63
    %v119 = vunpack.c.l.b16 %v64
    %v120 = vunpack.c.l.b16 %v65
    %v121 = vunpack.c.l.b16 %v66
    %v122 = vunpack.c.l.b16 %v67
    %v123 = vunpack.c.l.b16 %v68
    %v124 = vunpack.c.l.b16 %v69
    %v125 = vunpack.c.l.b16 %v70
    %v126 = vunpack.c.l.b16 %v71
    %v127 = vunpack.c.l.b16 %v72
    %v128 = vunpack.c.l.b16 %v73
    %v129 = vunpack.c.l.b16 %v74
    %v130 = vunpack.c.l.b16 %v75
    %v131 = vunpack.c.l.b16 %v76
    %v132 = vunpack.c.l.b16 %v77
    %v133 = vunpack.c.l.b16 %v78
    %v134 = vpack.c.b16 %v119, %v118
    %v135 = vpack.c.b16 %v121, %v120
    %v136 = vpack.c.b16 %v123, %v122
    %v137 = vpack.c.b16 %v125, %v124
    %v138 = vpack.c.b16 %v127, %v126
    %v139 = vpack.c.b16 %v129, %v128
    %v140 = vpack.c.b16 %v131, %v130
    %v141 = vpack.c.b16 %v133, %v132
    %v166 = vunpack.c.l.b16 %v79
    %v167 = vunpack.c.l.b16 %v80
    %v168 = vunpack.c.l.b16 %v81
    %v169 = vunpack.c.l.b16 %v82
    %v170 = vunpack.c.l.b16 %v83
    %v171 = vunpack.c.l.b16 %v84
    %v172 = vunpack.c.l.b16 %v85
    %v173 = vunpack.c.l.b16 %v86
    %v174 = vunpack.c.l.b16 %v87
    %v175 = vunpack.c.l.b16 %v88
    %v176 = vunpack.c.l.b16 %v89
    %v177 = vunpack.c.l.b16 %v90
    %v178 = vunpack.c.l.b16 %v91
    %v179 = vunpack.c.l.b16 %v92
    %v180 = vunpack.c.l.b16 %v93
    %v181 = vunpack.c.l.b16 %v94
    %v182 = vpack.c.b16 %v167, %v166
    %v183 = vpack.c.b16 %v169, %v168
    %v184 = vpack.c.b16 %v171, %v170
    %v185 = vpack.c.b16 %v173, %v172
    %v186 = vpack.c.b16 %v175, %v174
    %v187 = vpack.c.b16 %v177, %v176
    %v188 = vpack.c.b16 %v179, %v178
    %v189 = vpack.c.b16 %v181, %v180
    %198 = vmatprep.subr.bf16.mxu0 0
    %199 = vmatpush1.bf16.msra.mxu0 %v182
    %200 = vmatprep.subr.bf16.mxu0 0
    %201 = vmatpush1.bf16.msra.mxu0 %v183
    %202 = vmatprep.subr.bf16.mxu0 0
    %203 = vmatpush1.bf16.msra.mxu0 %v184
    %204 = vmatprep.subr.bf16.mxu0 0
    %205 = vmatpush1.bf16.msra.mxu0 %v185
    %206 = vmatprep.subr.bf16.mxu0 0
    %207 = vmatpush1.bf16.msra.mxu0 %v186
    %208 = vmatprep.subr.bf16.mxu0 0
    %209 = vmatpush1.bf16.msra.mxu0 %v187
    %210 = vmatprep.subr.bf16.mxu0 0
    %211 = vmatpush1.bf16.msra.mxu0 %v188
    %212 = vmatprep.subr.bf16.mxu0 0
    %213 = vmatpush1.bf16.msra.mxu0 %v189
    %214 = vmatprep.subr.bf16.mxu0 0
    %215 = vmatpush1.bf16.msra.mxu0 0
    %216 = vmatprep.subr.bf16.mxu0 0
    %217 = vmatpush1.bf16.msra.mxu0 0
    %218 = vmatprep.subr.bf16.mxu0 0
    %219 = vmatpush1.bf16.msra.mxu0 0
    %220 = vmatprep.subr.bf16.mxu0 0
    %221 = vmatpush1.bf16.msra.mxu0 0
    %222 = vmatprep.subr.bf16.mxu0 0
    %223 = vmatpush1.bf16.msra.mxu0 0
    %224 = vmatprep.subr.bf16.mxu0 0
    %225 = vmatpush1.bf16.msra.mxu0 0
    %226 = vmatprep.subr.bf16.mxu0 0
    %227 = vmatpush1.bf16.msra.mxu0 0
    %228 = vmatprep.subr.bf16.mxu0 0
    %229 = vmatpush1.bf16.msra.mxu0 0
    %230 = vmatprep.mubr.bf16.mxu0 0
    %231 = vmatmul.mubr.bf16.gmra.mrb[0].mxu0 %v134
    %v232 = vpop.f32.mrb[0].mxu0
    %v233 = vadd.f32 %v100, %v232
    %v234 = vpop.f32.mrb[0].mxu0
    %v235 = vpop.f32.mrb[0].mxu0
    %v236 = vadd.f32 %v100, %v235
    %v237 = vpop.f32.mrb[0].mxu0
    %238 = vmatprep.mubr.bf16.mxu0 0
    %239 = vmatmul.mubr.bf16.gmra.mrb[0].mxu0 %v135
    %v240 = vpop.f32.mrb[0].mxu0
    %v241 = vadd.f32 %v100, %v240
    %v242 = vpop.f32.mrb[0].mxu0
    %v243 = vpop.f32.mrb[0].mxu0
    %v244 = vadd.f32 %v100, %v243
    %v245 = vpop.f32.mrb[0].mxu0
    %246 = vmatprep.mubr.bf16.mxu0 0
    %247 = vmatmul.mubr.bf16.gmra.mrb[0].mxu0 %v136
    %v248 = vpop.f32.mrb[0].mxu0
    %v249 = vadd.f32 %v100, %v248
    %v250 = vpop.f32.mrb[0].mxu0
    %v251 = vpop.f32.mrb[0].mxu0
    %v252 = vadd.f32 %v100, %v251
    %v253 = vpop.f32.mrb[0].mxu0
    %254 = vmatprep.mubr.bf16.mxu0 0
    %255 = vmatmul.mubr.bf16.gmra.mrb[0].mxu0 %v137
    %v256 = vpop.f32.mrb[0].mxu0
    %v257 = vadd.f32 %v100, %v256
    %v258 = vpop.f32.mrb[0].mxu0
    %v259 = vpop.f32.mrb[0].mxu0
    %v260 = vadd.f32 %v100, %v259
    %v261 = vpop.f32.mrb[0].mxu0
    %262 = vmatprep.mubr.bf16.mxu0 0
    %263 = vmatmul.mubr.bf16.gmra.mrb[0].mxu0 %v138
    %v264 = vpop.f32.mrb[0].mxu0
    %v265 = vadd.f32 %v100, %v264
    %v266 = vpop.f32.mrb[0].mxu0
    %v267 = vpop.f32.mrb[0].mxu0
    %v268 = vadd.f32 %v100, %v267
    %v269 = vpop.f32.mrb[0].mxu0
    %270 = vmatprep.mubr.bf16.mxu0 0
    %271 = vmatmul.mubr.bf16.gmra.mrb[0].mxu0 %v139
    %v272 = vpop.f32.mrb[0].mxu0
    %v273 = vadd.f32 %v100, %v272
    %v274 = vpop.f32.mrb[0].mxu0
    %v275 = vpop.f32.mrb[0].mxu0
    %v276 = vadd.f32 %v100, %v275
    %v277 = vpop.f32.mrb[0].mxu0
    %278 = vmatprep.mubr.bf16.mxu0 0
    %279 = vmatmul.mubr.bf16.gmra.mrb[0].mxu0 %v140
    %v280 = vpop.f32.mrb[0].mxu0
    %v281 = vadd.f32 %v100, %v280
    %v282 = vpop.f32.mrb[0].mxu0
    %v283 = vpop.f32.mrb[0].mxu0
    %v284 = vadd.f32 %v100, %v283
    %v285 = vpop.f32.mrb[0].mxu0
    %286 = vmatprep.mubr.bf16.mxu0 0
    %287 = vmatmul.mubr.bf16.gmra.mrb[0].mxu0 %v141
    %v288 = vpop.f32.mrb[0].mxu0
    %v289 = vadd.f32 %v100, %v288
    %v290 = vpop.f32.mrb[0].mxu0
    %v291 = vpop.f32.mrb[0].mxu0
    %v292 = vadd.f32 %v100, %v291
    %v293 = vpop.f32.mrb[0].mxu0
    %294 = vdwg.mxu0
    %v295 = vsub.f32 0.0, %v233
    %v296 = vsub.f32 0.0, %v236
    %v297 = vsub.f32 0.0, %v241
    %v298 = vsub.f32 0.0, %v244
    %v299 = vsub.f32 0.0, %v249
    %v300 = vsub.f32 0.0, %v252
    %v301 = vsub.f32 0.0, %v257
    %v302 = vsub.f32 0.0, %v260
    %v303 = vsub.f32 0.0, %v265
    %v304 = vsub.f32 0.0, %v268
    %v305 = vsub.f32 0.0, %v273
    %v306 = vsub.f32 0.0, %v276
    %v307 = vsub.f32 0.0, %v281
    %v308 = vsub.f32 0.0, %v284
    %v309 = vsub.f32 0.0, %v289
    %v310 = vsub.f32 0.0, %v292
    %v311 = vmul.f32 %v295, 1.442695
    %v312 = vpow.pop %v311
    %v313 = vmul.f32 %v296, 1.442695
    %v314 = vpow.pop %v313
    %v315 = vmul.f32 %v297, 1.442695
    %v316 = vpow.pop %v315
    %v317 = vmul.f32 %v298, 1.442695
    %v318 = vpow.pop %v317
    %v319 = vmul.f32 %v299, 1.442695
    %v320 = vpow.pop %v319
    %v321 = vmul.f32 %v300, 1.442695
    %v322 = vpow.pop %v321
    %v323 = vmul.f32 %v301, 1.442695
    %v324 = vpow.pop %v323
    %v325 = vmul.f32 %v302, 1.442695
    %v326 = vpow.pop %v325
    %v327 = vmul.f32 %v303, 1.442695
    %v328 = vpow.pop %v327
    %v329 = vmul.f32 %v304, 1.442695
    %v330 = vpow.pop %v329
    %v331 = vmul.f32 %v305, 1.442695
    %v332 = vpow.pop %v331
    %v333 = vmul.f32 %v306, 1.442695
    %v334 = vpow.pop %v333
    %v335 = vmul.f32 %v307, 1.442695
    %v336 = vpow.pop %v335
    %v337 = vmul.f32 %v308, 1.442695
    %v338 = vpow.pop %v337
    %v339 = vmul.f32 %v309, 1.442695
    %v340 = vpow.pop %v339
    %v341 = vmul.f32 %v310, 1.442695
    %v342 = vpow.pop %v341
    %v343 = vadd.f32 %v312, 1.0
    %v344 = vadd.f32 %v314, 1.0
    %v345 = vadd.f32 %v316, 1.0
    %v346 = vadd.f32 %v318, 1.0
    %v347 = vadd.f32 %v320, 1.0
    %v348 = vadd.f32 %v322, 1.0
    %v349 = vadd.f32 %v324, 1.0
    %v350 = vadd.f32 %v326, 1.0
    %v351 = vadd.f32 %v328, 1.0
    %v352 = vadd.f32 %v330, 1.0
    %v353 = vadd.f32 %v332, 1.0
    %v354 = vadd.f32 %v334, 1.0
    %v355 = vadd.f32 %v336, 1.0
    %v356 = vadd.f32 %v338, 1.0
    %v357 = vadd.f32 %v340, 1.0
    %v358 = vadd.f32 %v342, 1.0
    %v359 = vrcp.pop %v343
    %v360 = vrcp.pop %v344
    %v361 = vrcp.pop %v345
    %v362 = vrcp.pop %v346
    %v363 = vrcp.pop %v347
    %v364 = vrcp.pop %v348
    %v365 = vrcp.pop %v349
    %v366 = vrcp.pop %v350
    %v367 = vrcp.pop %v351
    %v368 = vrcp.pop %v352
    %v369 = vrcp.pop %v353
    %v370 = vrcp.pop %v354
    %v371 = vrcp.pop %v355
    %v372 = vrcp.pop %v356
    %v373 = vrcp.pop %v357
    %v374 = vrcp.pop %v358
    %v375 = vmul.f32 %v233, %v359
    %v376 = vmul.f32 %v236, %v360
    %v377 = vmul.f32 %v241, %v361
    %v378 = vmul.f32 %v244, %v362
    %v379 = vmul.f32 %v249, %v363
    %v380 = vmul.f32 %v252, %v364
    %v381 = vmul.f32 %v257, %v365
    %v382 = vmul.f32 %v260, %v366
    %v383 = vmul.f32 %v265, %v367
    %v384 = vmul.f32 %v268, %v368
    %v385 = vmul.f32 %v273, %v369
    %v386 = vmul.f32 %v276, %v370
    %v387 = vmul.f32 %v281, %v371
    %v388 = vmul.f32 %v284, %v372
    %v389 = vmul.f32 %v289, %v373
    %v390 = vmul.f32 %v292, %v374
    %v391 = vpack.c.bf16 %v376, %v375
    %v392 = vpack.c.bf16 %v378, %v377
    %v393 = vpack.c.bf16 %v380, %v379
    %v394 = vpack.c.bf16 %v382, %v381
    %v395 = vpack.c.bf16 %v384, %v383
    %v396 = vpack.c.bf16 %v386, %v385
    %v397 = vpack.c.bf16 %v388, %v387
    %v398 = vpack.c.bf16 %v390, %v389
    %v399 = vld [vmem:[#allocation7] sm:$0xf]
    %v400 = vld [vmem:[#allocation7 + $0x4] sm:$0xf]
    %v401 = vld [vmem:[#allocation7 + $0x8] sm:$0xf]
    %v402 = vld [vmem:[#allocation7 + $0xc] sm:$0xf]
    %v403 = vld [vmem:[#allocation7 + $0x10] sm:$0xf]
    %v404 = vld [vmem:[#allocation7 + $0x14] sm:$0xf]
    %v405 = vld [vmem:[#allocation7 + $0x18] sm:$0xf]
    %v406 = vld [vmem:[#allocation7 + $0x1c] sm:$0xf]
    %v407 = vld [vmem:[#allocation7 + $0x20] sm:$0xf]
    %v408 = vld [vmem:[#allocation7 + $0x24] sm:$0xf]
    %v409 = vld [vmem:[#allocation7 + $0x28] sm:$0xf]
    %v410 = vld [vmem:[#allocation7 + $0x2c] sm:$0xf]
    %v411 = vld [vmem:[#allocation7 + $0x30] sm:$0xf]
    %v412 = vld [vmem:[#allocation7 + $0x34] sm:$0xf]
    %v413 = vld [vmem:[#allocation7 + $0x38] sm:$0xf]
    %v414 = vld [vmem:[#allocation7 + $0x3c] sm:$0xf]
    %v415 = vld [vmem:[%s4] sm:$0x1]
    %v417 = vlaneseq
    %v418 = vshrl.u32 %v417, 7
    %v419 = vsub.s32 0, %v418
    %v420 = vrot.slane %v415, %v419
    %v438 = vunpack.c.l.b16 %v399
    %v439 = vunpack.c.l.b16 %v400
    %v440 = vunpack.c.l.b16 %v401
    %v441 = vunpack.c.l.b16 %v402
    %v442 = vunpack.c.l.b16 %v403
    %v443 = vunpack.c.l.b16 %v404
    %v444 = vunpack.c.l.b16 %v405
    %v445 = vunpack.c.l.b16 %v406
    %v446 = vunpack.c.l.b16 %v407
    %v447 = vunpack.c.l.b16 %v408
    %v448 = vunpack.c.l.b16 %v409
    %v449 = vunpack.c.l.b16 %v410
    %v450 = vunpack.c.l.b16 %v411
    %v451 = vunpack.c.l.b16 %v412
    %v452 = vunpack.c.l.b16 %v413
    %v453 = vunpack.c.l.b16 %v414
    %v454 = vpack.c.b16 %v439, %v438
    %v455 = vpack.c.b16 %v441, %v440
    %v456 = vpack.c.b16 %v443, %v442
    %v457 = vpack.c.b16 %v445, %v444
    %v458 = vpack.c.b16 %v447, %v446
    %v459 = vpack.c.b16 %v449, %v448
    %v460 = vpack.c.b16 %v451, %v450
    %v461 = vpack.c.b16 %v453, %v452
    %470 = vmatprep.subr.bf16.mxu0 0
    %471 = vmatpush1.bf16.msra.mxu0 %v454
    %472 = vmatprep.subr.bf16.mxu0 0
    %473 = vmatpush1.bf16.msra.mxu0 %v455
    %474 = vmatprep.subr.bf16.mxu0 0
    %475 = vmatpush1.bf16.msra.mxu0 %v456
    %476 = vmatprep.subr.bf16.mxu0 0
    %477 = vmatpush1.bf16.msra.mxu0 %v457
    %478 = vmatprep.subr.bf16.mxu0 0
    %479 = vmatpush1.bf16.msra.mxu0 %v458
    %480 = vmatprep.subr.bf16.mxu0 0
    %481 = vmatpush1.bf16.msra.mxu0 %v459
    %482 = vmatprep.subr.bf16.mxu0 0
    %483 = vmatpush1.bf16.msra.mxu0 %v460
    %484 = vmatprep.subr.bf16.mxu0 0
    %485 = vmatpush1.bf16.msra.mxu0 %v461
    %486 = vmatprep.subr.bf16.mxu0 0
    %487 = vmatpush1.bf16.msra.mxu0 0
    %488 = vmatprep.subr.bf16.mxu0 0
    %489 = vmatpush1.bf16.msra.mxu0 0
    %490 = vmatprep.subr.bf16.mxu0 0
    %491 = vmatpush1.bf16.msra.mxu0 0
    %492 = vmatprep.subr.bf16.mxu0 0
    %493 = vmatpush1.bf16.msra.mxu0 0
    %494 = vmatprep.subr.bf16.mxu0 0
    %495 = vmatpush1.bf16.msra.mxu0 0
    %496 = vmatprep.subr.bf16.mxu0 0
    %497 = vmatpush1.bf16.msra.mxu0 0
    %498 = vmatprep.subr.bf16.mxu0 0
    %499 = vmatpush1.bf16.msra.mxu0 0
    %500 = vmatprep.subr.bf16.mxu0 0
    %501 = vmatpush1.bf16.msra.mxu0 0
    %502 = vmatprep.mubr.bf16.mxu0 0
    %503 = vmatmul.mubr.bf16.gmra.mrb[0].mxu0 %v391
    %v504 = vpop.f32.mrb[0].mxu0
    %v505 = vadd.f32 %v420, %v504
    %v506 = vpop.f32.mrb[0].mxu0
    %v507 = vpop.f32.mrb[0].mxu0
    %v508 = vadd.f32 %v420, %v507
    %v509 = vpop.f32.mrb[0].mxu0
    %510 = vmatprep.mubr.bf16.mxu0 0
    %511 = vmatmul.mubr.bf16.gmra.mrb[0].mxu0 %v392
    %v512 = vpop.f32.mrb[0].mxu0
    %v513 = vadd.f32 %v420, %v512
    %v514 = vpop.f32.mrb[0].mxu0
    %v515 = vpop.f32.mrb[0].mxu0
    %v516 = vadd.f32 %v420, %v515
    %v517 = vpop.f32.mrb[0].mxu0
    %518 = vmatprep.mubr.bf16.mxu0 0
    %519 = vmatmul.mubr.bf16.gmra.mrb[0].mxu0 %v393
    %v520 = vpop.f32.mrb[0].mxu0
    %v521 = vadd.f32 %v420, %v520
    %v522 = vpop.f32.mrb[0].mxu0
    %v523 = vpop.f32.mrb[0].mxu0
    %v524 = vadd.f32 %v420, %v523
    %v525 = vpop.f32.mrb[0].mxu0
    %526 = vmatprep.mubr.bf16.mxu0 0
    %527 = vmatmul.mubr.bf16.gmra.mrb[0].mxu0 %v394
    %v528 = vpop.f32.mrb[0].mxu0
    %v529 = vadd.f32 %v420, %v528
    %v530 = vpop.f32.mrb[0].mxu0
    %v531 = vpop.f32.mrb[0].mxu0
    %v532 = vadd.f32 %v420, %v531
    %v533 = vpop.f32.mrb[0].mxu0
    %534 = vmatprep.mubr.bf16.mxu0 0
    %535 = vmatmul.mubr.bf16.gmra.mrb[0].mxu0 %v395
    %v536 = vpop.f32.mrb[0].mxu0
    %v537 = vadd.f32 %v420, %v536
    %v538 = vpop.f32.mrb[0].mxu0
    %v539 = vpop.f32.mrb[0].mxu0
    %v540 = vadd.f32 %v420, %v539
    %v541 = vpop.f32.mrb[0].mxu0
    %542 = vmatprep.mubr.bf16.mxu0 0
    %543 = vmatmul.mubr.bf16.gmra.mrb[0].mxu0 %v396
    %v544 = vpop.f32.mrb[0].mxu0
    %v545 = vadd.f32 %v420, %v544
    %v546 = vpop.f32.mrb[0].mxu0
    %v547 = vpop.f32.mrb[0].mxu0
    %v548 = vadd.f32 %v420, %v547
    %v549 = vpop.f32.mrb[0].mxu0
    %550 = vmatprep.mubr.bf16.mxu0 0
    %551 = vmatmul.mubr.bf16.gmra.mrb[0].mxu0 %v397
    %v552 = vpop.f32.mrb[0].mxu0
    %v553 = vadd.f32 %v420, %v552
    %v554 = vpop.f32.mrb[0].mxu0
    %v555 = vpop.f32.mrb[0].mxu0
    %v556 = vadd.f32 %v420, %v555
    %v557 = vpop.f32.mrb[0].mxu0
    %558 = vmatprep.mubr.bf16.mxu0 0
    %559 = vmatmul.mubr.bf16.gmra.mrb[0].mxu0 %v398
    %v560 = vpop.f32.mrb[0].mxu0
    %v561 = vadd.f32 %v420, %v560
    %v562 = vpop.f32.mrb[0].mxu0
    %v563 = vpop.f32.mrb[0].mxu0
    %v564 = vadd.f32 %v420, %v563
    %v565 = vpop.f32.mrb[0].mxu0
    %566 = vdwg.mxu0
    %v567 = vsub.f32 0.0, %v505
    %v568 = vsub.f32 0.0, %v508
    %v569 = vsub.f32 0.0, %v513
    %v570 = vsub.f32 0.0, %v516
    %v571 = vsub.f32 0.0, %v521
    %v572 = vsub.f32 0.0, %v524
    %v573 = vsub.f32 0.0, %v529
    %v574 = vsub.f32 0.0, %v532
    %v575 = vsub.f32 0.0, %v537
    %v576 = vsub.f32 0.0, %v540
    %v577 = vsub.f32 0.0, %v545
    %v578 = vsub.f32 0.0, %v548
    %v579 = vsub.f32 0.0, %v553
    %v580 = vsub.f32 0.0, %v556
    %v581 = vsub.f32 0.0, %v561
    %v582 = vsub.f32 0.0, %v564
    %v583 = vmul.f32 %v567, 1.442695
    %v584 = vpow.pop %v583
    %v585 = vmul.f32 %v568, 1.442695
    %v586 = vpow.pop %v585
    %v587 = vmul.f32 %v569, 1.442695
    %v588 = vpow.pop %v587
    %v589 = vmul.f32 %v570, 1.442695
    %v590 = vpow.pop %v589
    %v591 = vmul.f32 %v571, 1.442695
    %v592 = vpow.pop %v591
    %v593 = vmul.f32 %v572, 1.442695
    %v594 = vpow.pop %v593
    %v595 = vmul.f32 %v573, 1.442695
    %v596 = vpow.pop %v595
    %v597 = vmul.f32 %v574, 1.442695
    %v598 = vpow.pop %v597
    %v599 = vmul.f32 %v575, 1.442695
    %v600 = vpow.pop %v599
    %v601 = vmul.f32 %v576, 1.442695
    %v602 = vpow.pop %v601
    %v603 = vmul.f32 %v577, 1.442695
    %v604 = vpow.pop %v603
    %v605 = vmul.f32 %v578, 1.442695
    %v606 = vpow.pop %v605
    %v607 = vmul.f32 %v579, 1.442695
    %v608 = vpow.pop %v607
    %v609 = vmul.f32 %v580, 1.442695
    %v610 = vpow.pop %v609
    %v611 = vmul.f32 %v581, 1.442695
    %v612 = vpow.pop %v611
    %v613 = vmul.f32 %v582, 1.442695
    %v614 = vpow.pop %v613
    %v615 = vadd.f32 %v584, 1.0
    %v616 = vadd.f32 %v586, 1.0
    %v617 = vadd.f32 %v588, 1.0
    %v618 = vadd.f32 %v590, 1.0
    %v619 = vadd.f32 %v592, 1.0
    %v620 = vadd.f32 %v594, 1.0
    %v621 = vadd.f32 %v596, 1.0
    %v622 = vadd.f32 %v598, 1.0
    %v623 = vadd.f32 %v600, 1.0
    %v624 = vadd.f32 %v602, 1.0
    %v625 = vadd.f32 %v604, 1.0
    %v626 = vadd.f32 %v606, 1.0
    %v627 = vadd.f32 %v608, 1.0
    %v628 = vadd.f32 %v610, 1.0
    %v629 = vadd.f32 %v612, 1.0
    %v630 = vadd.f32 %v614, 1.0
    %v631 = vrcp.pop %v615
    %v632 = vrcp.pop %v616
    %v633 = vrcp.pop %v617
    %v634 = vrcp.pop %v618
    %v635 = vrcp.pop %v619
    %v636 = vrcp.pop %v620
    %v637 = vrcp.pop %v621
    %v638 = vrcp.pop %v622
    %v639 = vrcp.pop %v623
    %v640 = vrcp.pop %v624
    %v641 = vrcp.pop %v625
    %v642 = vrcp.pop %v626
    %v643 = vrcp.pop %v627
    %v644 = vrcp.pop %v628
    %v645 = vrcp.pop %v629
    %v646 = vrcp.pop %v630
    %v647 = vmul.f32 %v505, %v631
    %v648 = vmul.f32 %v508, %v632
    %v649 = vmul.f32 %v513, %v633
    %v650 = vmul.f32 %v516, %v634
    %v651 = vmul.f32 %v521, %v635
    %v652 = vmul.f32 %v524, %v636
    %v653 = vmul.f32 %v529, %v637
    %v654 = vmul.f32 %v532, %v638
    %v655 = vmul.f32 %v537, %v639
    %v656 = vmul.f32 %v540, %v640
    %v657 = vmul.f32 %v545, %v641
    %v658 = vmul.f32 %v548, %v642
    %v659 = vmul.f32 %v553, %v643
    %v660 = vmul.f32 %v556, %v644
    %v661 = vmul.f32 %v561, %v645
    %v662 = vmul.f32 %v564, %v646
    %v663 = vpack.c.bf16 %v648, %v647
    %v664 = vpack.c.bf16 %v650, %v649
    %v665 = vpack.c.bf16 %v652, %v651
    %v666 = vpack.c.bf16 %v654, %v653
    %v667 = vpack.c.bf16 %v656, %v655
    %v668 = vpack.c.bf16 %v658, %v657
    %v669 = vpack.c.bf16 %v660, %v659
    %v670 = vpack.c.bf16 %v662, %v661
    %v679 = vunpack.c.l.b16 %v663
    %v680 = vunpack.c.h.b16 %v663
    %v681 = vunpack.c.l.b16 %v664
    %v682 = vunpack.c.h.b16 %v664
    %v683 = vunpack.c.l.b16 %v665
    %v684 = vunpack.c.h.b16 %v665
    %v685 = vunpack.c.l.b16 %v666
    %v686 = vunpack.c.h.b16 %v666
    %v687 = vunpack.c.l.b16 %v667
    %v688 = vunpack.c.h.b16 %v667
    %v689 = vunpack.c.l.b16 %v668
    %v690 = vunpack.c.h.b16 %v668
    %v691 = vunpack.c.l.b16 %v669
    %v692 = vunpack.c.h.b16 %v669
    %v693 = vunpack.c.l.b16 %v670
    %v694 = vunpack.c.h.b16 %v670
    %v695 = vpack.c.b16 %v679, %v679
    %v696 = vpack.c.b16 %v680, %v680
    %v697 = vpack.c.b16 %v681, %v681
    %v698 = vpack.c.b16 %v682, %v682
    %v699 = vpack.c.b16 %v683, %v683
    %v700 = vpack.c.b16 %v684, %v684
    %v701 = vpack.c.b16 %v685, %v685
    %v702 = vpack.c.b16 %v686, %v686
    %v703 = vpack.c.b16 %v687, %v687
    %v704 = vpack.c.b16 %v688, %v688
    %v705 = vpack.c.b16 %v689, %v689
    %v706 = vpack.c.b16 %v690, %v690
    %v707 = vpack.c.b16 %v691, %v691
    %v708 = vpack.c.b16 %v692, %v692
    %v709 = vpack.c.b16 %v693, %v693
    %v710 = vpack.c.b16 %v694, %v694
    %727 = vst [vmem:[#allocation8] sm:$0xf] %v695
    %728 = vst [vmem:[#allocation8 + $0x4] sm:$0xf] %v696
    %729 = vst [vmem:[#allocation8 + $0x8] sm:$0xf] %v697
    %730 = vst [vmem:[#allocation8 + $0xc] sm:$0xf] %v698
    %731 = vst [vmem:[#allocation8 + $0x10] sm:$0xf] %v699
    %732 = vst [vmem:[#allocation8 + $0x14] sm:$0xf] %v700
    %733 = vst [vmem:[#allocation8 + $0x18] sm:$0xf] %v701
    %734 = vst [vmem:[#allocation8 + $0x1c] sm:$0xf] %v702
    %735 = vst [vmem:[#allocation8 + $0x20] sm:$0xf] %v703
    %736 = vst [vmem:[#allocation8 + $0x24] sm:$0xf] %v704
    %737 = vst [vmem:[#allocation8 + $0x28] sm:$0xf] %v705
    %738 = vst [vmem:[#allocation8 + $0x2c] sm:$0xf] %v706
    %739 = vst [vmem:[#allocation8 + $0x30] sm:$0xf] %v707
    %740 = vst [vmem:[#allocation8 + $0x34] sm:$0xf] %v708
    %741 = vst [vmem:[#allocation8 + $0x38] sm:$0xf] %v709
    %742 = vst [vmem:[#allocation8 + $0x3c] sm:$0xf] %v710
    // Predicated region
    $region34: #{tpu_custom_call.1} parent=1 // pred_check
      _
    $region35: #{tpu_custom_call.1} parent=1 // pred_check_branch
      %744 = sbr.rel (0) target = $region37
    $region36: #{tpu_custom_call.1} parent=1 // pred_region
      %s746 = ssub.s32 1024, 1024
      %747 = vsyncadd [#allocation4], %s746
      %s748 = sshll.u32 [#allocation8], 4
      %s749 = int_to_ptr.vmem [resolvable:$true] %s748
      %754 = dma.vmem_to_hbm [thread:$0]  %s749, 1024, %s5, [#allocation4], 64, 64, 4
    $region37: #{tpu_custom_call.1} parent=1 // pred_fallthru
      _
    // Predicated region
    $region38: #{tpu_custom_call.1} parent=1 // pred_check
      _
    $region39: #{tpu_custom_call.1} parent=1 // pred_check_branch
      %756 = sbr.rel (0) target = $region41
    $region40: #{tpu_custom_call.1} parent=1 // pred_region
      %757 = dma.done [#allocation4], 1024
    $region41: #{tpu_custom_call.1} parent=1 // pred_fallthru
      _
    %758 = vsyncpa [#allocation3], 1
    %759 = vsyncpa [#allocation6], 1
    %760 = vsyncpa [#allocation4], 1

</llo_original>
